<compile_context>
chip_gen: v7x
topology: tpu7x:2x2x1
jax: 0.10.0
libtpu: 0.0.40
codegen_flags: <defaults>
</compile_context>

<pallas_src>
import functools

import jax
import jax.numpy as jnp
from jax import lax
from jax.experimental import pallas as pl
from jax.experimental.pallas import tpu as pltpu


def _round_up(v, m):
    return ((v + m - 1) // m) * m


# ----------------------------------------------------------------------------
# Main kernel: per row-tile, compute
#   track_h  = x @ w_h + b_h                      (track_builder stand-in)
#   new_emb  = relu(track_h @ w_tp + b_tp)        (track_processer stand-in)
#   logit^T  = w_cls^T @ new_emb^T + b_cls^T      (classify head, lane-dense)
# Row tiles are independent -> grid axis is "parallel" (megacore on v7x).
# ----------------------------------------------------------------------------
def _logit_kernel(x_ref, w_h_ref, b_h_ref, w_tp_ref, b_tp_ref,
                  w_cls_t_ref, b_cls_t_ref, logit_t_ref):
    cdt = w_h_ref.dtype                                # bf16 compute dtype

    x = x_ref[...]                                     # (tile_m, F_IN) bf16
    h = jnp.dot(x, w_h_ref[...], preferred_element_type=jnp.float32)
    h = h + b_h_ref[...]                               # f32 (tile_m, H)

    ne = jnp.dot(h.astype(cdt), w_tp_ref[...],
                 preferred_element_type=jnp.float32)
    ne = jnp.maximum(ne + b_tp_ref[...], 0.0)          # f32 (tile_m, H)

    # classify: Dropout (eval identity) + Linear, computed transposed so the
    # output block (C, tile_m) is lane-dense (contraction on last dims of
    # both operands -> no in-kernel transpose needed).
    lt = lax.dot_general(w_cls_t_ref[...], ne.astype(cdt),
                         (((1,), (1,)), ((), ())),
                         preferred_element_type=jnp.float32)   # (C, tile_m)
    logit_t_ref[...] = (lt + b_cls_t_ref[...]).astype(logit_t_ref.dtype)


# ----------------------------------------------------------------------------
# Tiny second kernel: CE loss over the A anchor rows only.
#   g = x[anchor] @ w_tb + b_tb   (== track_w[anchor], since build is row-wise)
#   loss = mean(logsumexp(g) - g[target])
# Kept in f32 (negligible cost; exactness for the loss).
# ----------------------------------------------------------------------------
def _anchor_loss_kernel(xa_ref, pred_ref, w_tb_ref, b_tb_ref, loss_ref,
                        *, n_anchor, k_anchor):
    g = jnp.dot(xa_ref[...], w_tb_ref[...],
                preferred_element_type=jnp.float32) + b_tb_ref[...]   # (A, K)
    m = jnp.max(g, axis=-1, keepdims=True)
    lse = m + jnp.log(jnp.sum(jnp.exp(g - m), axis=-1, keepdims=True))
    col = lax.broadcasted_iota(jnp.int32, (n_anchor, k_anchor), 1)
    onehot = (col == pred_ref[...]).astype(jnp.float32)
    tgt = jnp.sum(onehot * g, axis=-1, keepdims=True)
    loss = jnp.sum(lse - tgt) * (1.0 / n_anchor)
    loss_ref[...] = jnp.broadcast_to(loss, (1, 1))


# ----------------------------------------------------------------------------
# One-time parameter preparation (hoisted out of the per-call forward):
# bf16 casts for the MXU-fed weights, classify weight pre-transposed for the
# lane-dense output, f32 kept for biases and the tiny loss path.
# ----------------------------------------------------------------------------
def prepare_params(params, compute_dtype=jnp.bfloat16):
    return {
        "w_h":     params["w_h"].astype(compute_dtype),
        "b0_h":    params["b0_h"].astype(jnp.float32),
        "w_tp":    params["w_tp"].astype(compute_dtype),
        "b0_tp":   params["b0_tp"].astype(jnp.float32),
        "w_cls_t": params["w_cls"].T.astype(compute_dtype),   # (C, H)
        "b_cls_t": params["b_cls"].T.astype(jnp.float32),     # (C, 1)
        "w_tb":    params["w_tb"].astype(jnp.float32),
        "b0_tb":   params["b0_tb"].astype(jnp.float32),
    }


# ----------------------------------------------------------------------------
# anchorMtGNN.forward
# ----------------------------------------------------------------------------
def anchor_mtgnn_forward(prep, x, anchor, pred_anchor, *, tile_m=256):
    n, f_in = x.shape
    hidden = prep["w_h"].shape[1]
    num_classes = prep["w_cls_t"].shape[0]
    k_anchor = prep["w_tb"].shape[1]
    a = anchor.shape[0]
    compute_dtype = prep["w_h"].dtype

    # tile_m: multiple of 128 (lane-dense transposed output & bf16 sublane
    # packing), clamped so tiny inputs don't over-pad.
    tile_m = max(128, _round_up(min(int(tile_m), _round_up(n, 128)), 128))
    n_pad = _round_up(n, tile_m)

    x_c = x.astype(compute_dtype)
    if n_pad != n:
        x_c = jnp.pad(x_c, ((0, n_pad - n), (0, 0)))

    # Advisory cost for XLA's scheduler around the custom call.
    wbytes = ((prep["w_h"].size + prep["w_tp"].size + prep["w_cls_t"].size)
              * prep["w_h"].dtype.itemsize
              + (prep["b0_h"].size + prep["b0_tp"].size + prep["b_cls_t"].size) * 4)
    cost = pl.CostEstimate(
        flops=2 * n_pad * (f_in * hidden + hidden * hidden + hidden * num_classes),
        transcendentals=0,
        bytes_accessed=int(n_pad * f_in * x_c.dtype.itemsize
                           + n_pad * num_classes * 4 + wbytes),
    )

    _const = lambda i: (0, 0)

    # --- main kernel: logits (transposed, lane-dense writeback) -------------
    logit_t = pl.pallas_call(
        _logit_kernel,
        out_shape=jax.ShapeDtypeStruct((num_classes, n_pad), jnp.float32),
        grid_spec=pltpu.PrefetchScalarGridSpec(
            num_scalar_prefetch=0,
            grid=(n_pad // tile_m,),
            in_specs=[
                pl.BlockSpec((tile_m, f_in), lambda i: (i, 0)),      # x (tiled)
                pl.BlockSpec((f_in, hidden), _const),                # w_h
                pl.BlockSpec((1, hidden), _const),                   # b0_h
                pl.BlockSpec((hidden, hidden), _const),              # w_tp
                pl.BlockSpec((1, hidden), _const),                   # b0_tp
                pl.BlockSpec((num_classes, hidden), _const),         # w_cls^T
                pl.BlockSpec((num_classes, 1), _const),              # b_cls^T
            ],
            out_specs=pl.BlockSpec((num_classes, tile_m), lambda i: (0, i)),
        ),
        compiler_params=pltpu.CompilerParams(
            # Row tiles are independent -> shard across TensorCores (v7x).
            dimension_semantics=("parallel",),
            # Raise v5e's 16 MiB scoped default; safe on v6e/v7x.
            vmem_limit_bytes=32 * 1024 * 1024,
        ),
        cost_estimate=cost,
    )(x_c, prep["w_h"], prep["b0_h"], prep["w_tp"], prep["b0_tp"],
      prep["w_cls_t"], prep["b_cls_t"])

    logit = logit_t[:, :n].T                                     # (N, C)

    # --- tiny loss kernel over A anchor rows ---------------------------------
    anchor_i = anchor.astype(jnp.int32)
    x_anchor = x[anchor_i].astype(jnp.float32)                   # (A, F_IN)
    pred = pred_anchor.astype(jnp.int32).reshape(a, 1)

    loss = pl.pallas_call(
        functools.partial(_anchor_loss_kernel, n_anchor=a, k_anchor=k_anchor),
        out_shape=jax.ShapeDtypeStruct((1, 1), jnp.float32),
        grid_spec=pltpu.PrefetchScalarGridSpec(
            num_scalar_prefetch=0,
            grid=(1,),
            in_specs=[
                pl.BlockSpec((a, f_in), _const),                 # x[anchor]
                pl.BlockSpec((a, 1), _const),                    # pred_anchor
                pl.BlockSpec((f_in, k_anchor), _const),          # w_tb
                pl.BlockSpec((1, k_anchor), _const),             # b0_tb
            ],
            out_specs=pl.BlockSpec((1, 1), _const),
        ),
        compiler_params=pltpu.CompilerParams(
            dimension_semantics=("arbitrary",)),
    )(x_anchor, pred, prep["w_tb"], prep["b0_tb"])

    return logit, loss[0, 0]


# ----------------------------------------------------------------------------
# Pure-JAX reference (same bf16 cast points as the kernel for the logit path;
# f32 for the loss path) for a correctness sanity check.
# ----------------------------------------------------------------------------
def reference_forward(params, x, anchor, pred_anchor, compute_dtype=jnp.bfloat16):
    cd = compute_dtype
    h = jnp.dot(x.astype(cd), params["w_h"].astype(cd),
                preferred_element_type=jnp.float32) + params["b0_h"]
    ne = jnp.maximum(
        jnp.dot(h.astype(cd), params["w_tp"].astype(cd),
                preferred_element_type=jnp.float32) + params["b0_tp"], 0.0)
    logit = jnp.dot(ne.astype(cd), params["w_cls"].astype(cd),
                    preferred_element_type=jnp.float32) + params["b_cls"]
    g = x[anchor.astype(jnp.int32)] @ params["w_tb"] + params["b0_tb"]
    lse = jax.scipy.special.logsumexp(g, axis=-1)
    tl = jnp.take_along_axis(g, pred_anchor[:, None].astype(jnp.int32), axis=-1)[:, 0]
    w_loss = jnp.mean(lse - tl)
    return logit, w_loss


if __name__ == "__main__":
    # Small but realistic-ish shapes; N deliberately not a tile multiple to
    # exercise the padded last tile.
    N, F_IN, HIDDEN, NUM_CLASSES, K_ANCHOR, A = 500, 64, 64, 8, 16, 16

    key = jax.random.PRNGKey(0)
    ks = jax.random.split(key, 8)
    x = jax.random.normal(ks[0], (N, F_IN), jnp.float32)

    params = {
        "w_h":   jax.random.normal(ks[1], (F_IN, HIDDEN), jnp.float32) * 0.1,
        "b0_h":  jnp.zeros((1, HIDDEN), jnp.float32),
        "w_tb":  jax.random.normal(ks[2], (F_IN, K_ANCHOR), jnp.float32) * 0.1,
        "b0_tb": jnp.zeros((1, K_ANCHOR), jnp.float32),
        "w_tp":  jax.random.normal(ks[3], (HIDDEN, HIDDEN), jnp.float32) * 0.1,
        "b0_tp": jnp.zeros((1, HIDDEN), jnp.float32),
        "w_cls": jax.random.normal(ks[4], (HIDDEN, NUM_CLASSES), jnp.float32) * 0.1,
        "b_cls": jax.random.normal(ks[5], (1, NUM_CLASSES), jnp.float32) * 0.01,
    }

    anchor = jax.random.randint(ks[6], (A,), 0, N)
    pred_anchor = jax.random.randint(ks[7], (A,), 0, K_ANCHOR)

    prep = prepare_params(params)           # one-time parameter prep
    fwd = jax.jit(anchor_mtgnn_forward, static_argnames=("tile_m",))

    logit, w_loss = fwd(prep, x, anchor, pred_anchor, tile_m=256)
    jax.block_until_ready((logit, w_loss))

    ref_logit, ref_loss = reference_forward(params, x, anchor, pred_anchor)
    assert logit.shape == (N, NUM_CLASSES)
    assert jnp.allclose(logit, ref_logit, atol=1e-2, rtol=1e-2)
    assert jnp.allclose(w_loss, ref_loss, atol=3e-2, rtol=3e-2)

    print("KERNEL_OK")
</pallas_src>

<mosaic_0001>
module attributes {stable_mosaic.version = 11 : i64} {
  func.func @_logit_kernel(%arg0: i32, %arg1: memref<256x64xbf16, #tpu.memory_space<vmem>>, %arg2: memref<64x64xbf16, #tpu.memory_space<vmem>>, %arg3: memref<1x64xf32, #tpu.memory_space<vmem>>, %arg4: memref<64x64xbf16, #tpu.memory_space<vmem>>, %arg5: memref<1x64xf32, #tpu.memory_space<vmem>>, %arg6: memref<8x64xbf16, #tpu.memory_space<vmem>>, %arg7: memref<8x1xf32, #tpu.memory_space<vmem>>, %arg8: memref<8x256xf32, #tpu.memory_space<vmem>>) attributes {dimension_semantics = [#tpu.dimension_semantics<parallel>], iteration_bounds = array<i64: 2>, scalar_prefetch = 0 : i64, scratch_operands = 0 : i64, tpu.core_type = #tpu.core_type<tc>, window_params = [{transform_indices = @transform_0, window_bounds = array<i64: 256, 64>}, {pipeline_mode = #tpu.pipeline_mode<synchronous>, transform_indices = @transform_1, window_bounds = array<i64: 64, 64>}, {pipeline_mode = #tpu.pipeline_mode<synchronous>, transform_indices = @transform_2, window_bounds = array<i64: 1, 64>}, {pipeline_mode = #tpu.pipeline_mode<synchronous>, transform_indices = @transform_3, window_bounds = array<i64: 64, 64>}, {pipeline_mode = #tpu.pipeline_mode<synchronous>, transform_indices = @transform_4, window_bounds = array<i64: 1, 64>}, {pipeline_mode = #tpu.pipeline_mode<synchronous>, transform_indices = @transform_5, window_bounds = array<i64: 8, 64>}, {pipeline_mode = #tpu.pipeline_mode<synchronous>, transform_indices = @transform_6, window_bounds = array<i64: 8, 1>}, {transform_indices = @transform_7, window_bounds = array<i64: 8, 256>}]} {
    %c0 = arith.constant 0 : index
    %c0_0 = arith.constant 0 : index
    %0 = vector.load %arg1[%c0, %c0_0] : memref<256x64xbf16, #tpu.memory_space<vmem>>, vector<256x64xbf16>
    %c0_1 = arith.constant 0 : index
    %c0_2 = arith.constant 0 : index
    %1 = vector.load %arg2[%c0_1, %c0_2] : memref<64x64xbf16, #tpu.memory_space<vmem>>, vector<64x64xbf16>
    %cst = arith.constant dense<0.000000e+00> : vector<256x64xf32>
    %2 = tpu.matmul %0, %1, %cst {dimension_numbers = #tpu.dot_dimension_numbers<[1], [0], [0], [1], [0, 0, 1, 1], [], []>} : vector<256x64xbf16>, vector<64x64xbf16>, vector<256x64xf32> -> vector<256x64xf32>
    %c0_3 = arith.constant 0 : index
    %c0_4 = arith.constant 0 : index
    %3 = vector.load %arg3[%c0_3, %c0_4] : memref<1x64xf32, #tpu.memory_space<vmem>>, vector<1x64xf32>
    %4 = vector.broadcast %3 : vector<1x64xf32> to vector<256x64xf32>
    %5 = arith.addf %2, %4 : vector<256x64xf32>
    %6 = arith.truncf %5 : vector<256x64xf32> to vector<256x64xbf16>
    %c0_5 = arith.constant 0 : index
    %c0_6 = arith.constant 0 : index
    %7 = vector.load %arg4[%c0_5, %c0_6] : memref<64x64xbf16, #tpu.memory_space<vmem>>, vector<64x64xbf16>
    %cst_7 = arith.constant dense<0.000000e+00> : vector<256x64xf32>
    %8 = tpu.matmul %6, %7, %cst_7 {dimension_numbers = #tpu.dot_dimension_numbers<[1], [0], [0], [1], [0, 0, 1, 1], [], []>} : vector<256x64xbf16>, vector<64x64xbf16>, vector<256x64xf32> -> vector<256x64xf32>
    %c0_8 = arith.constant 0 : index
    %c0_9 = arith.constant 0 : index
    %9 = vector.load %arg5[%c0_8, %c0_9] : memref<1x64xf32, #tpu.memory_space<vmem>>, vector<1x64xf32>
    %10 = vector.broadcast %9 : vector<1x64xf32> to vector<256x64xf32>
    %11 = arith.addf %8, %10 : vector<256x64xf32>
    %cst_10 = arith.constant 0.000000e+00 : f32
    %12 = vector.broadcast %cst_10 : f32 to vector<256x64xf32>
    %13 = arith.maximumf %11, %12 : vector<256x64xf32>
    %c0_11 = arith.constant 0 : index
    %c0_12 = arith.constant 0 : index
    %14 = vector.load %arg6[%c0_11, %c0_12] : memref<8x64xbf16, #tpu.memory_space<vmem>>, vector<8x64xbf16>
    %15 = arith.truncf %13 : vector<256x64xf32> to vector<256x64xbf16>
    %cst_13 = arith.constant dense<0.000000e+00> : vector<8x256xf32>
    %16 = tpu.matmul %14, %15, %cst_13 {dimension_numbers = #tpu.dot_dimension_numbers<[1], [1], [0], [0], [0, 0, 1, 0], [], []>} : vector<8x64xbf16>, vector<256x64xbf16>, vector<8x256xf32> -> vector<8x256xf32>
    %c0_14 = arith.constant 0 : index
    %c0_15 = arith.constant 0 : index
    %17 = vector.load %arg7[%c0_14, %c0_15] : memref<8x1xf32, #tpu.memory_space<vmem>>, vector<8x1xf32>
    %18 = vector.broadcast %17 : vector<8x1xf32> to vector<8x256xf32>
    %19 = arith.addf %16, %18 : vector<8x256xf32>
    %c0_16 = arith.constant 0 : index
    %c0_17 = arith.constant 0 : index
    %20 = vector.load %arg8[%c0_16, %c0_17] : memref<8x256xf32, #tpu.memory_space<vmem>>, vector<8x256xf32>
    tpu.vector_store %arg8[%c0_16, %c0_17], %19 {strides = array<i32>} : memref<8x256xf32, #tpu.memory_space<vmem>>, vector<8x256xf32>,
    return
  }
  func.func @transform_0(%arg0: i32) -> (i32, i32) {
    %c0_i32 = arith.constant 0 : i32
    %c0_i32_0 = arith.constant 0 : i32
    return %arg0, %c0_i32 : i32, i32
  }
  func.func @transform_1(%arg0: i32) -> (i32, i32) {
    %c0_i32 = arith.constant 0 : i32
    %c0_i32_0 = arith.constant 0 : i32
    %c0_i32_1 = arith.constant 0 : i32
    return %c0_i32, %c0_i32_0 : i32, i32
  }
  func.func @transform_2(%arg0: i32) -> (i32, i32) {
    %c0_i32 = arith.constant 0 : i32
    %c0_i32_0 = arith.constant 0 : i32
    %c0_i32_1 = arith.constant 0 : i32
    return %c0_i32, %c0_i32_0 : i32, i32
  }
  func.func @transform_3(%arg0: i32) -> (i32, i32) {
    %c0_i32 = arith.constant 0 : i32
    %c0_i32_0 = arith.constant 0 : i32
    %c0_i32_1 = arith.constant 0 : i32
    return %c0_i32, %c0_i32_0 : i32, i32
  }
  func.func @transform_4(%arg0: i32) -> (i32, i32) {
    %c0_i32 = arith.constant 0 : i32
    %c0_i32_0 = arith.constant 0 : i32
    %c0_i32_1 = arith.constant 0 : i32
    return %c0_i32, %c0_i32_0 : i32, i32
  }
  func.func @transform_5(%arg0: i32) -> (i32, i32) {
    %c0_i32 = arith.constant 0 : i32
    %c0_i32_0 = arith.constant 0 : i32
    %c0_i32_1 = arith.constant 0 : i32
    return %c0_i32, %c0_i32_0 : i32, i32
  }
  func.func @transform_6(%arg0: i32) -> (i32, i32) {
    %c0_i32 = arith.constant 0 : i32
    %c0_i32_0 = arith.constant 0 : i32
    %c0_i32_1 = arith.constant 0 : i32
    return %c0_i32, %c0_i32_0 : i32, i32
  }
  func.func @transform_7(%arg0: i32) -> (i32, i32) {
    %c0_i32 = arith.constant 0 : i32
    %c0_i32_0 = arith.constant 0 : i32
    return %c0_i32, %arg0 : i32, i32
  }
}

module attributes {stable_mosaic.version = 11 : i64} {
  func.func @_anchor_loss_kernel(%arg0: i32, %arg1: memref<16x64xf32, #tpu.memory_space<vmem>>, %arg2: memref<16x1xi32, #tpu.memory_space<vmem>>, %arg3: memref<64x16xf32, #tpu.memory_space<vmem>>, %arg4: memref<1x16xf32, #tpu.memory_space<vmem>>, %arg5: memref<1x1xf32, #tpu.memory_space<vmem>>) attributes {dimension_semantics = [#tpu.dimension_semantics<arbitrary>], iteration_bounds = array<i64: 1>, scalar_prefetch = 0 : i64, scratch_operands = 0 : i64, tpu.core_type = #tpu.core_type<tc>, window_params = [{pipeline_mode = #tpu.pipeline_mode<synchronous>, transform_indices = @transform_0, window_bounds = array<i64: 16, 64>}, {pipeline_mode = #tpu.pipeline_mode<synchronous>, transform_indices = @transform_1, window_bounds = array<i64: 16, 1>}, {pipeline_mode = #tpu.pipeline_mode<synchronous>, transform_indices = @transform_2, window_bounds = array<i64: 64, 16>}, {pipeline_mode = #tpu.pipeline_mode<synchronous>, transform_indices = @transform_3, window_bounds = array<i64: 1, 16>}, {pipeline_mode = #tpu.pipeline_mode<synchronous>, transform_indices = @transform_4, window_bounds = array<i64: 1, 1>}]} {
    %c0 = arith.constant 0 : index
    %c0_0 = arith.constant 0 : index
    %0 = vector.load %arg1[%c0, %c0_0] : memref<16x64xf32, #tpu.memory_space<vmem>>, vector<16x64xf32>
    %c0_1 = arith.constant 0 : index
    %c0_2 = arith.constant 0 : index
    %1 = vector.load %arg3[%c0_1, %c0_2] : memref<64x16xf32, #tpu.memory_space<vmem>>, vector<64x16xf32>
    %cst = arith.constant dense<0.000000e+00> : vector<16x16xf32>
    %2 = tpu.matmul %0, %1, %cst {dimension_numbers = #tpu.dot_dimension_numbers<[1], [0], [0], [1], [0, 0, 1, 1], [], []>} : vector<16x64xf32>, vector<64x16xf32>, vector<16x16xf32> -> vector<16x16xf32>
    %c0_3 = arith.constant 0 : index
    %c0_4 = arith.constant 0 : index
    %3 = vector.load %arg4[%c0_3, %c0_4] : memref<1x16xf32, #tpu.memory_space<vmem>>, vector<1x16xf32>
    %4 = vector.broadcast %3 : vector<1x16xf32> to vector<16x16xf32>
    %5 = arith.addf %2, %4 : vector<16x16xf32>
    %cst_5 = arith.constant dense<0xFF800000> : vector<16xf32>
    %6 = vector.multi_reduction <maximumf>, %5, %cst_5 [1] : vector<16x16xf32> to vector<16xf32>
    %7 = vector.shape_cast %6 : vector<16xf32> to vector<16x1xf32>
    %8 = vector.broadcast %7 : vector<16x1xf32> to vector<16x16xf32>
    %9 = arith.subf %5, %8 : vector<16x16xf32>
    %10 = math.exp %9 : vector<16x16xf32>
    %cst_6 = arith.constant dense<0.000000e+00> : vector<16xf32>
    %11 = vector.multi_reduction <add>, %10, %cst_6 [1] : vector<16x16xf32> to vector<16xf32>
    %12 = vector.shape_cast %11 : vector<16xf32> to vector<16x1xf32>
    %13 = math.log %12 : vector<16x1xf32>
    %14 = arith.addf %7, %13 : vector<16x1xf32>
    %15 = tpu.iota {dimensions = array<i32: 1>} : vector<16x16xi32>
    %c0_7 = arith.constant 0 : index
    %c0_8 = arith.constant 0 : index
    %16 = vector.load %arg2[%c0_7, %c0_8] : memref<16x1xi32, #tpu.memory_space<vmem>>, vector<16x1xi32>
    %17 = vector.broadcast %16 : vector<16x1xi32> to vector<16x16xi32>
    %18 = arith.cmpi eq, %15, %17 : vector<16x16xi32>
    %19 = arith.extui %18 : vector<16x16xi1> to vector<16x16xi32>
    %20 = arith.sitofp %19 : vector<16x16xi32> to vector<16x16xf32>
    %21 = arith.mulf %20, %5 : vector<16x16xf32>
    %cst_9 = arith.constant dense<0.000000e+00> : vector<16xf32>
    %22 = vector.multi_reduction <add>, %21, %cst_9 [1] : vector<16x16xf32> to vector<16xf32>
    %23 = vector.shape_cast %22 : vector<16xf32> to vector<16x1xf32>
    %24 = arith.subf %14, %23 : vector<16x1xf32>
    %25 = vector.shape_cast %24 : vector<16x1xf32> to vector<1x16x1xf32>
    %cst_10 = arith.constant dense<0.000000e+00> : vector<1xf32>
    %26 = vector.multi_reduction <add>, %25, %cst_10 [1, 2] : vector<1x16x1xf32> to vector<1xf32>
    %27 = vector.shape_cast %26 : vector<1xf32> to vector<1x1x1xf32>
    %28 = vector.extract %27[0, 0, 0] : f32 from vector<1x1x1xf32>
    %cst_11 = arith.constant 6.250000e-02 : f32
    %29 = arith.mulf %28, %cst_11 : f32
    %30 = vector.broadcast %29 : f32 to vector<1x1xf32>
    %c0_12 = arith.constant 0 : index
    %c0_13 = arith.constant 0 : index
    %31 = vector.load %arg5[%c0_12, %c0_13] : memref<1x1xf32, #tpu.memory_space<vmem>>, vector<1x1xf32>
    tpu.vector_store %arg5[%c0_12, %c0_13], %30 {strides = array<i32>} : memref<1x1xf32, #tpu.memory_space<vmem>>, vector<1x1xf32>,
    return
  }
  func.func @transform_0(%arg0: i32) -> (i32, i32) {
    %c0_i32 = arith.constant 0 : i32
    %c0_i32_0 = arith.constant 0 : i32
    %c0_i32_1 = arith.constant 0 : i32
    return %c0_i32, %c0_i32_0 : i32, i32
  }
  func.func @transform_1(%arg0: i32) -> (i32, i32) {
    %c0_i32 = arith.constant 0 : i32
    %c0_i32_0 = arith.constant 0 : i32
    %c0_i32_1 = arith.constant 0 : i32
    return %c0_i32, %c0_i32_0 : i32, i32
  }
  func.func @transform_2(%arg0: i32) -> (i32, i32) {
    %c0_i32 = arith.constant 0 : i32
    %c0_i32_0 = arith.constant 0 : i32
    %c0_i32_1 = arith.constant 0 : i32
    return %c0_i32, %c0_i32_0 : i32, i32
  }
  func.func @transform_3(%arg0: i32) -> (i32, i32) {
    %c0_i32 = arith.constant 0 : i32
    %c0_i32_0 = arith.constant 0 : i32
    %c0_i32_1 = arith.constant 0 : i32
    return %c0_i32, %c0_i32_0 : i32, i32
  }
  func.func @transform_4(%arg0: i32) -> (i32, i32) {
    %c0_i32 = arith.constant 0 : i32
    %c0_i32_0 = arith.constant 0 : i32
    %c0_i32_1 = arith.constant 0 : i32
    return %c0_i32, %c0_i32_0 : i32, i32
  }
}

</mosaic_0001>

<llo_original>
// kernel: anchor_mtgnn_forward.3
$region0: #{anchor_mtgnn_forward.3}
  #allocation0 [shape = 'u32[]', space=smem, size = 0x4, offset = 0x4, fixed_abs, tag = 'smem constant byte address 0x4 - core index']
  #allocation1 [shape = 'u32[144,128]{1,0:T(1,128)}', space=vmem, size = 0x12000, scoped, tag = 'internal scratch']
  %s0 = inlined_call_operand.vmem [shape: f32[16,64], index: 0, kind: input, shape index: {}]
  %s1 = inlined_call_operand.vmem [shape: s32[16,1], index: 1, kind: input, shape index: {}]
  %s2 = inlined_call_operand.vmem [shape: f32[64,16], index: 2, kind: input, shape index: {}]
  %s3 = inlined_call_operand.vmem [shape: f32[1,16], index: 3, kind: input, shape index: {}]
  %s4 = inlined_call_operand.hbm [shape: f32[1,1], index: 4, kind: output, shape index: {}]
  %s5 = sld [smem:[#allocation0]]
  $region26: #{anchor_mtgnn_forward.3} parent=0
    _
  %s7 = ssub.s32 1, %s5
  %s8 = scalar_select 0, %s7, %s5
  $region1: #{anchor_mtgnn_forward.3} parent=0
    #allocation2 [shape = 'u8[512]{0}', space=vmem, size = 0x400, scoped, tag = 'output window, operand 0, single buffered']
    #allocation3 [shape = 's32[1]{0}', space=sflag, size = 0x4, scoped, tag = 'scoped memory for anchor_mtgnn_forward.3']
    %9 = vsyncpa [#allocation3], 0
    // Predicated region
    $region2: #{anchor_mtgnn_forward.3} parent=1 // pred_check
      _
    $region3: #{anchor_mtgnn_forward.3} parent=1 // pred_check_branch
      %11 = sbr.rel (0) target = $region5
    $region4: #{anchor_mtgnn_forward.3} parent=1 // pred_region
      _
    $region5: #{anchor_mtgnn_forward.3} parent=1 // pred_fallthru
      _
    // Predicated region
    $region6: #{anchor_mtgnn_forward.3} parent=1 // pred_check
      _
    $region7: #{anchor_mtgnn_forward.3} parent=1 // pred_check_branch
      %13 = sbr.rel (0) target = $region9
    $region8: #{anchor_mtgnn_forward.3} parent=1 // pred_region
      _
    $region9: #{anchor_mtgnn_forward.3} parent=1 // pred_fallthru
      _
    // Predicated region
    $region10: #{anchor_mtgnn_forward.3} parent=1 // pred_check
      _
    $region11: #{anchor_mtgnn_forward.3} parent=1 // pred_check_branch
      %15 = sbr.rel (0) target = $region13
    $region12: #{anchor_mtgnn_forward.3} parent=1 // pred_region
      _
    $region13: #{anchor_mtgnn_forward.3} parent=1 // pred_fallthru
      _
    // Predicated region
    $region14: #{anchor_mtgnn_forward.3} parent=1 // pred_check
      _
    $region15: #{anchor_mtgnn_forward.3} parent=1 // pred_check_branch
      %17 = sbr.rel (0) target = $region17
    $region16: #{anchor_mtgnn_forward.3} parent=1 // pred_region
      _
    $region17: #{anchor_mtgnn_forward.3} parent=1 // pred_fallthru
      _
    %v18 = vld [vmem:[%s0] sm:$0xff]
    %v19 = vld [vmem:[%s0 + $0x8] sm:$0xff]
    %v20 = vld [vmem:[%s2] sm:$0xff]
    %v21 = vld [vmem:[%s2 + $0x8] sm:$0xff]
    %v22 = vld [vmem:[%s2 + $0x10] sm:$0xff]
    %v23 = vld [vmem:[%s2 + $0x18] sm:$0xff]
    %v24 = vld [vmem:[%s2 + $0x20] sm:$0xff]
    %v25 = vld [vmem:[%s2 + $0x28] sm:$0xff]
    %v26 = vld [vmem:[%s2 + $0x30] sm:$0xff]
    %v27 = vld [vmem:[%s2 + $0x38] sm:$0xff]
    %v28 = vld [vmem:[%s3] sm:$0x1]
    %v30 = vlaneseq
    %v31 = vshrl.u32 %v30, 7
    %v32 = vsub.s32 0, %v31
    %v33 = vrot.slane %v28, %v32
    %vm35 = vcmask 523264
    %v37 = vsel %vm35, %v18, 0
    %v40 = vsel %vm35, %v19, 0
    %42 = vmatprep.subr.mxu0 0.0
    %43 = vmatpush1.msra.mxu0 %v20
    %44 = vmatprep.subr.mxu0 0.0
    %45 = vmatpush1.msra.mxu0 %v21
    %46 = vmatprep.subr.mxu0 0.0
    %47 = vmatpush1.msra.mxu0 %v22
    %48 = vmatprep.subr.mxu0 0.0
    %49 = vmatpush1.msra.mxu0 %v23
    %50 = vmatprep.subr.mxu0 0.0
    %51 = vmatpush1.msra.mxu0 %v24
    %52 = vmatprep.subr.mxu0 0.0
    %53 = vmatpush1.msra.mxu0 %v25
    %54 = vmatprep.subr.mxu0 0.0
    %55 = vmatpush1.msra.mxu0 %v26
    %56 = vmatprep.subr.mxu0 0.0
    %57 = vmatpush1.msra.mxu0 %v27
    %58 = vmatprep.subr.mxu0 0.0
    %59 = vmatpush1.msra.mxu0 0.0
    %60 = vmatprep.subr.mxu0 0.0
    %61 = vmatpush1.msra.mxu0 0.0
    %62 = vmatprep.subr.mxu0 0.0
    %63 = vmatpush1.msra.mxu0 0.0
    %64 = vmatprep.subr.mxu0 0.0
    %65 = vmatpush1.msra.mxu0 0.0
    %66 = vmatprep.subr.mxu0 0.0
    %67 = vmatpush1.msra.mxu0 0.0
    %68 = vmatprep.subr.mxu0 0.0
    %69 = vmatpush1.msra.mxu0 0.0
    %70 = vmatprep.subr.mxu0 0.0
    %71 = vmatpush1.msra.mxu0 0.0
    %72 = vmatprep.subr.mxu0 0.0
    %73 = vmatpush1.msra.mxu0 0.0
    %74 = vmatprep.subr.mxu0 0.0
    %75 = vmatpush1.msra.mxu0 0.0
    %76 = vmatprep.subr.mxu0 0.0
    %77 = vmatpush1.msra.mxu0 0.0
    %78 = vmatprep.subr.mxu0 0.0
    %79 = vmatpush1.msra.mxu0 0.0
    %80 = vmatprep.subr.mxu0 0.0
    %81 = vmatpush1.msra.mxu0 0.0
    %82 = vmatprep.subr.mxu0 0.0
    %83 = vmatpush1.msra.mxu0 0.0
    %84 = vmatprep.subr.mxu0 0.0
    %85 = vmatpush1.msra.mxu0 0.0
    %86 = vmatprep.subr.mxu0 0.0
    %87 = vmatpush1.msra.mxu0 0.0
    %88 = vmatprep.subr.mxu0 0.0
    %89 = vmatpush1.msra.mxu0 0.0
    %90 = vmatprep.subr.mxu0 0.0
    %91 = vmatpush1.msra.mxu0 0.0
    %92 = vmatprep.subr.mxu0 0.0
    %93 = vmatpush1.msra.mxu0 0.0
    %94 = vmatprep.subr.mxu0 0.0
    %95 = vmatpush1.msra.mxu0 0.0
    %96 = vmatprep.subr.mxu0 0.0
    %97 = vmatpush1.msra.mxu0 0.0
    %98 = vmatprep.subr.mxu0 0.0
    %99 = vmatpush1.msra.mxu0 0.0
    %100 = vmatprep.subr.mxu0 0.0
    %101 = vmatpush1.msra.mxu0 0.0
    %102 = vmatprep.subr.mxu0 0.0
    %103 = vmatpush1.msra.mxu0 0.0
    %104 = vmatprep.subr.mxu0 0.0
    %105 = vmatpush1.msra.mxu0 0.0
    %106 = vmatprep.mubr.f32.mxu0 0.0
    %107 = vmatmul.mubr.f32.gmra.mrb[0].mxu0 %v37
    %v108 = vpop.f32.mrb[0].mxu0
    %v109 = vadd.f32 %v33, %v108
    %v110 = vpop.f32.mrb[0].mxu0
    %111 = vmatprep.mubr.f32.mxu0 0.0
    %112 = vmatmul.mubr.f32.gmra.mrb[0].mxu0 %v40
    %v113 = vpop.f32.mrb[0].mxu0
    %v114 = vadd.f32 %v33, %v113
    %v115 = vpop.f32.mrb[0].mxu0
    %116 = vdwg.mxu0
    %vm117 = vcmask 130048
    %v118 = vsel %vm117, %v109, -inf
    %119 = vmax.xlane.f32.xlu0 %v118
    %v120 = vpop.xlane.xlu0 %119
    %v121 = vsel %vm117, %v114, -inf
    %122 = vmax.xlane.f32.xlu0 %v121
    %v123 = vpop.xlane.xlu0 %122
    %v124 = vsub.f32 %v109, %v120
    %v125 = vsub.f32 %v114, %v123
    %v126 = vmul.f32 %v124, 1.442695
    %v127 = vpow.pop %v126
    %v128 = vmul.f32 %v125, 1.442695
    %v129 = vpow.pop %v128
    %v130 = vsel %vm117, %v127, 0.0
    %131 = vadd.xlane.f32.xlu0 %v130
    %v132 = vpop.xlane.xlu0 %131
    %v133 = vsel %vm117, %v129, 0.0
    %134 = vadd.xlane.f32.xlu0 %v133
    %v135 = vpop.xlane.xlu0 %134
    %v136 = vlog2.pop %v132
    %v137 = vmul.f32 %v136, 0.6931472
    %v138 = vlog2.pop %v135
    %v139 = vmul.f32 %v138, 0.6931472
    %v140 = vadd.f32 %v120, %v137
    %v141 = vadd.f32 %v123, %v139
    %v142 = vlaneseq
    %v143 = vand.u32 %v142, 127
    %v144 = vld [vmem:[%s1] sm:$0xff]
    %v145 = vld [vmem:[%s1 + $0x8] sm:$0xff]
    %146 = vset.pattern.permute.xlu0 0
    %147 = vperm.xlu0 %146, %v144
    %v148 = vpop.permute.xlu0 %147
    %149 = vset.pattern.permute.xlu0 0
    %150 = vperm.xlu0 %149, %v145
    %v151 = vpop.permute.xlu0 %150
    %vm152 = vcmp.eq.s32.totalorder %v143, %v148
    %vm153 = vcmp.eq.s32.totalorder %v143, %v151
    %v154 = vsel %vm152, 1, 0
    %v155 = vsel %vm153, 1, 0
    %v156 = vcvt.s32.f32 %v154
    %v157 = vcvt.s32.f32 %v155
    %v158 = vmul.f32 %v156, %v109
    %v159 = vmul.f32 %v157, %v114
    %v160 = vsel %vm117, %v158, 0.0
    %161 = vadd.xlane.f32.xlu0 %v160
    %v162 = vpop.xlane.xlu0 %161
    %v163 = vsel %vm117, %v159, 0.0
    %164 = vadd.xlane.f32.xlu0 %v163
    %v165 = vpop.xlane.xlu0 %164
    %v166 = vsub.f32 %v140, %v162
    %v167 = vsub.f32 %v141, %v165
    %vm168 = vcmask 7168
    %v169 = vsel %vm168, %v166, 0.0
    %v170 = vsel %vm168, %v167, 0.0
    %v171 = vadd.f32 %v169, %v170
    %172 = vadd.xlane.f32.xlu0 %v171
    %v173 = vpop.xlane.xlu0 %172
    %v174 = vrot.slane %v173, 4
    %v175 = vadd.f32 %v173, %v174
    %v176 = vrot.slane %v175, 2
    %v177 = vadd.f32 %v175, %v176
    %v178 = vrot.slane %v177, 1
    %v179 = vadd.f32 %v177, %v178
    %s180 = vtos %v179
    %s181 = smul.f32 %s180, 0.0625
    %v182 = vstv %s181
    %vm183 = vcmask 0
    %184 = vst.msk [vmem:[#allocation2] sm:$0x1] %vm183, %v182
    // Predicated region
    $region18: #{anchor_mtgnn_forward.3} parent=1 // pred_check
      _
    $region19: #{anchor_mtgnn_forward.3} parent=1 // pred_check_branch
      %186 = sbr.rel (0) target = $region21
    $region20: #{anchor_mtgnn_forward.3} parent=1 // pred_region
      %s188 = ssub.s32 16, 16
      %189 = vsyncadd [#allocation3], %s188
      %s191 = sshll.u32 [#allocation2], 4
      %s192 = int_to_ptr.vmem [resolvable:$true] %s191
      %194 = dma.vmem_to_hbm [thread:$0]  %s192, 16, %s4, [#allocation3]
    $region21: #{anchor_mtgnn_forward.3} parent=1 // pred_fallthru
      _
    // Predicated region
    $region22: #{anchor_mtgnn_forward.3} parent=1 // pred_check
      _
    $region23: #{anchor_mtgnn_forward.3} parent=1 // pred_check_branch
      %196 = sbr.rel (0) target = $region25
    $region24: #{anchor_mtgnn_forward.3} parent=1 // pred_region
      %197 = dma.done [#allocation3], 16
    $region25: #{anchor_mtgnn_forward.3} parent=1 // pred_fallthru
      _
    %198 = vsyncpa [#allocation3], 1

// kernel: anchor_mtgnn_forward.2
$region0: #{anchor_mtgnn_forward.2}
  #allocation0 [shape = 'u32[]', space=smem, size = 0x4, offset = 0x4, fixed_abs, tag = 'smem constant byte address 0x4 - core index']
  #allocation1 [shape = 'u32[144,128]{1,0:T(1,128)}', space=vmem, size = 0x12000, scoped, tag = 'internal scratch']
  %s0 = inlined_call_operand.vmem [shape: bf16[512,64], index: 0, kind: input, shape index: {}]
  %s1 = inlined_call_operand.vmem [shape: bf16[64,64], index: 1, kind: input, shape index: {}]
  %s2 = inlined_call_operand.vmem [shape: f32[1,64], index: 2, kind: input, shape index: {}]
  %s3 = inlined_call_operand.vmem [shape: bf16[64,64], index: 3, kind: input, shape index: {}]
  %s4 = inlined_call_operand.vmem [shape: f32[1,64], index: 4, kind: input, shape index: {}]
  %s5 = inlined_call_operand.vmem [shape: bf16[8,64], index: 5, kind: input, shape index: {}]
  %s6 = inlined_call_operand.vmem [shape: f32[8,1], index: 6, kind: input, shape index: {}]
  %s7 = inlined_call_operand.vmem [shape: f32[8,512], index: 7, kind: output, shape index: {}]
  %s8 = sld [smem:[#allocation0]]
  $region61: #{anchor_mtgnn_forward.2} parent=0
    _
  %s10 = ssub.s32 1, %s8
  %s11 = scalar_select 0, %s10, %s8
  loop: start=0, step=1, limit=4
  $region2: #{anchor_mtgnn_forward.2} parent=0 // loop_pre_header
    _
  $region3: #{anchor_mtgnn_forward.2} parent=0 // loop_header
    %s13 = sphi 0, %s17
    %p14 = scmp.ge.s32.totalorder %s13, 4
    %s23 = sphi 0, %s25
    %s26 = sphi 0, %s23
    %s27 = sphi 0, %s26
    %s43 = sphi 0, %s27
    %s47 = sphi 0, %s47
    %s49 = sphi 0, %s47
    %s50 = sphi 0, %s49
    %s64 = sphi 0, %s50
    %s68 = sphi 0, %s68
    %s70 = sphi 0, %s68
    %s71 = sphi 0, %s70
    %s85 = sphi 0, %s71
    %s89 = sphi 0, %s89
    %s91 = sphi 0, %s89
    %s92 = sphi 0, %s91
    %s106 = sphi 0, %s92
    %s110 = sphi 0, %s110
    %s112 = sphi 0, %s110
    %s113 = sphi 0, %s112
    %s127 = sphi 0, %s113
    %s131 = sphi 0, %s131
    %s133 = sphi 0, %s131
    %s134 = sphi 0, %s133
    %s148 = sphi 0, %s134
    %s152 = sphi 0, %s152
    %s154 = sphi 0, %s152
    %s155 = sphi 0, %s154
    %s169 = sphi 0, %s155
    %s175 = sphi 0, %s177
    %s178 = sphi 0, %s175
    %s179 = sphi 0, %s178
    %s195 = sphi 0, %s179
  $region4: #{anchor_mtgnn_forward.2} parent=0 // loop_header_branch
    %16 = sbr.rel (%p14) target = $region8
  $region5: #{anchor_mtgnn_forward.2} parent=0 // loop_body
    %s18 = ssub.s32 %s13, 1
    %s19 = ssub.s32 %s13, 2
    %s20 = sadd.s32 %s13, 1
    %s21 = ssub.s32 %s13, %s20
    %p22 = scmp.eq.s32.totalorder %s21, 0
    %s24 = sadd.s32 %s23, 1
    %s25 = scalar_select %p22, %s23, %s24
    %p28 = pneg %p22
    %p29 = scmp.eq.s32.totalorder %s13, 1
    %p30 = por %p28, %p29
    %p31 = scmp.ne.s32.totalorder %s23, %s26
    %p32 = scmp.eq.s32.totalorder %s13, 0
    %p33 = por %p31, %p32
    %p34 = scmp.ne.s32.totalorder %s23, %s26
    %p35 = scmp.eq.s32.totalorder %s18, 1
    %p36 = por %p34, %p35
    %p37 = scmp.ne.s32.totalorder %s26, %s27
    %p38 = scmp.eq.s32.totalorder %s18, 0
    %p39 = por %p37, %p38
    %p40 = scmp.ne.s32.totalorder %s26, %s27
    %p41 = scmp.eq.s32.totalorder %s19, 1
    %p42 = por %p40, %p41
    %p44 = scmp.ne.s32.totalorder %s27, %s43
    %p45 = scmp.eq.s32.totalorder %s19, 0
    %p46 = por %p44, %p45
    %s48 = sadd.s32 %s47, 1
    %p51 = scmp.eq.s32.totalorder %s13, 1
    %p52 = scmp.ne.s32.totalorder %s47, %s49
    %p53 = scmp.eq.s32.totalorder %s13, 0
    %p54 = por %p52, %p53
    %p55 = scmp.ne.s32.totalorder %s47, %s49
    %p56 = scmp.eq.s32.totalorder %s18, 1
    %p57 = por %p55, %p56
    %p58 = scmp.ne.s32.totalorder %s49, %s50
    %p59 = scmp.eq.s32.totalorder %s18, 0
    %p60 = por %p58, %p59
    %p61 = scmp.ne.s32.totalorder %s49, %s50
    %p62 = scmp.eq.s32.totalorder %s19, 1
    %p63 = por %p61, %p62
    %p65 = scmp.ne.s32.totalorder %s50, %s64
    %p66 = scmp.eq.s32.totalorder %s19, 0
    %p67 = por %p65, %p66
    %s69 = sadd.s32 %s68, 1
    %p72 = scmp.eq.s32.totalorder %s13, 1
    %p73 = scmp.ne.s32.totalorder %s68, %s70
    %p74 = scmp.eq.s32.totalorder %s13, 0
    %p75 = por %p73, %p74
    %p76 = scmp.ne.s32.totalorder %s68, %s70
    %p77 = scmp.eq.s32.totalorder %s18, 1
    %p78 = por %p76, %p77
    %p79 = scmp.ne.s32.totalorder %s70, %s71
    %p80 = scmp.eq.s32.totalorder %s18, 0
    %p81 = por %p79, %p80
    %p82 = scmp.ne.s32.totalorder %s70, %s71
    %p83 = scmp.eq.s32.totalorder %s19, 1
    %p84 = por %p82, %p83
    %p86 = scmp.ne.s32.totalorder %s71, %s85
    %p87 = scmp.eq.s32.totalorder %s19, 0
    %p88 = por %p86, %p87
    %s90 = sadd.s32 %s89, 1
    %p93 = scmp.eq.s32.totalorder %s13, 1
    %p94 = scmp.ne.s32.totalorder %s89, %s91
    %p95 = scmp.eq.s32.totalorder %s13, 0
    %p96 = por %p94, %p95
    %p97 = scmp.ne.s32.totalorder %s89, %s91
    %p98 = scmp.eq.s32.totalorder %s18, 1
    %p99 = por %p97, %p98
    %p100 = scmp.ne.s32.totalorder %s91, %s92
    %p101 = scmp.eq.s32.totalorder %s18, 0
    %p102 = por %p100, %p101
    %p103 = scmp.ne.s32.totalorder %s91, %s92
    %p104 = scmp.eq.s32.totalorder %s19, 1
    %p105 = por %p103, %p104
    %p107 = scmp.ne.s32.totalorder %s92, %s106
    %p108 = scmp.eq.s32.totalorder %s19, 0
    %p109 = por %p107, %p108
    %s111 = sadd.s32 %s110, 1
    %p114 = scmp.eq.s32.totalorder %s13, 1
    %p115 = scmp.ne.s32.totalorder %s110, %s112
    %p116 = scmp.eq.s32.totalorder %s13, 0
    %p117 = por %p115, %p116
    %p118 = scmp.ne.s32.totalorder %s110, %s112
    %p119 = scmp.eq.s32.totalorder %s18, 1
    %p120 = por %p118, %p119
    %p121 = scmp.ne.s32.totalorder %s112, %s113
    %p122 = scmp.eq.s32.totalorder %s18, 0
    %p123 = por %p121, %p122
    %p124 = scmp.ne.s32.totalorder %s112, %s113
    %p125 = scmp.eq.s32.totalorder %s19, 1
    %p126 = por %p124, %p125
    %p128 = scmp.ne.s32.totalorder %s113, %s127
    %p129 = scmp.eq.s32.totalorder %s19, 0
    %p130 = por %p128, %p129
    %s132 = sadd.s32 %s131, 1
    %p135 = scmp.eq.s32.totalorder %s13, 1
    %p136 = scmp.ne.s32.totalorder %s131, %s133
    %p137 = scmp.eq.s32.totalorder %s13, 0
    %p138 = por %p136, %p137
    %p139 = scmp.ne.s32.totalorder %s131, %s133
    %p140 = scmp.eq.s32.totalorder %s18, 1
    %p141 = por %p139, %p140
    %p142 = scmp.ne.s32.totalorder %s133, %s134
    %p143 = scmp.eq.s32.totalorder %s18, 0
    %p144 = por %p142, %p143
    %p145 = scmp.ne.s32.totalorder %s133, %s134
    %p146 = scmp.eq.s32.totalorder %s19, 1
    %p147 = por %p145, %p146
    %p149 = scmp.ne.s32.totalorder %s134, %s148
    %p150 = scmp.eq.s32.totalorder %s19, 0
    %p151 = por %p149, %p150
    %s153 = sadd.s32 %s152, 1
    %p156 = scmp.eq.s32.totalorder %s13, 1
    %p157 = scmp.ne.s32.totalorder %s152, %s154
    %p158 = scmp.eq.s32.totalorder %s13, 0
    %p159 = por %p157, %p158
    %p160 = scmp.ne.s32.totalorder %s152, %s154
    %p161 = scmp.eq.s32.totalorder %s18, 1
    %p162 = por %p160, %p161
    %p163 = scmp.ne.s32.totalorder %s154, %s155
    %p164 = scmp.eq.s32.totalorder %s18, 0
    %p165 = por %p163, %p164
    %p166 = scmp.ne.s32.totalorder %s154, %s155
    %p167 = scmp.eq.s32.totalorder %s19, 1
    %p168 = por %p166, %p167
    %p170 = scmp.ne.s32.totalorder %s155, %s169
    %p171 = scmp.eq.s32.totalorder %s19, 0
    %p172 = por %p170, %p171
    %s173 = ssub.s32 %s13, %s20
    %p174 = scmp.eq.s32.totalorder %s173, 0
    %s176 = sadd.s32 %s175, 1
    %s177 = scalar_select %p174, %s175, %s176
    %p180 = pneg %p174
    %p181 = scmp.eq.s32.totalorder %s13, 1
    %p182 = por %p180, %p181
    %p183 = scmp.ne.s32.totalorder %s175, %s178
    %p184 = scmp.eq.s32.totalorder %s13, 0
    %p185 = por %p183, %p184
    %p186 = scmp.ne.s32.totalorder %s175, %s178
    %p187 = scmp.eq.s32.totalorder %s18, 1
    %p188 = por %p186, %p187
    %p189 = scmp.ne.s32.totalorder %s178, %s179
    %p190 = scmp.eq.s32.totalorder %s18, 0
    %p191 = por %p189, %p190
    %p192 = scmp.ne.s32.totalorder %s178, %s179
    %p193 = scmp.eq.s32.totalorder %s19, 1
    %p194 = por %p192, %p193
    %p196 = scmp.ne.s32.totalorder %s179, %s195
    %p197 = scmp.eq.s32.totalorder %s19, 0
    %p198 = por %p196, %p197
    %p199 = scmp.le.s32.totalorder 1, %s13
    %p200 = scmp.lt.s32.totalorder %s13, 3
    %p201 = pnand %p199, %p200
    %p202 = pneg %p201
    // Predicated region
    $region9: #{anchor_mtgnn_forward.2} parent=5 // pred_check
      _
    $region10: #{anchor_mtgnn_forward.2} parent=5 // pred_check_branch
      %204 = sbr.rel (%p201) target = $region12
    $region11: #{anchor_mtgnn_forward.2} parent=5 // pred_region
      %s205 = ssub.s32 %s13, 1
      // Predicated region
      $region13: #{anchor_mtgnn_forward.2} parent=11 // pred_check
        %p206 = pneg %p60
      $region14: #{anchor_mtgnn_forward.2} parent=11 // pred_check_branch
        %208 = sbr.rel (%p206) target = $region16
      $region15: #{anchor_mtgnn_forward.2} parent=11 // pred_region
        _
      $region16: #{anchor_mtgnn_forward.2} parent=11 // pred_fallthru
        _
      // Predicated region
      $region17: #{anchor_mtgnn_forward.2} parent=11 // pred_check
        %p209 = pneg %p81
      $region18: #{anchor_mtgnn_forward.2} parent=11 // pred_check_branch
        %211 = sbr.rel (%p209) target = $region20
      $region19: #{anchor_mtgnn_forward.2} parent=11 // pred_region
        _
      $region20: #{anchor_mtgnn_forward.2} parent=11 // pred_fallthru
        _
      // Predicated region
      $region21: #{anchor_mtgnn_forward.2} parent=11 // pred_check
        %p212 = pneg %p102
      $region22: #{anchor_mtgnn_forward.2} parent=11 // pred_check_branch
        %214 = sbr.rel (%p212) target = $region24
      $region23: #{anchor_mtgnn_forward.2} parent=11 // pred_region
        _
      $region24: #{anchor_mtgnn_forward.2} parent=11 // pred_fallthru
        _
      // Predicated region
      $region25: #{anchor_mtgnn_forward.2} parent=11 // pred_check
        %p215 = pneg %p123
      $region26: #{anchor_mtgnn_forward.2} parent=11 // pred_check_branch
        %217 = sbr.rel (%p215) target = $region28
      $region27: #{anchor_mtgnn_forward.2} parent=11 // pred_region
        _
      $region28: #{anchor_mtgnn_forward.2} parent=11 // pred_fallthru
        _
      // Predicated region
      $region29: #{anchor_mtgnn_forward.2} parent=11 // pred_check
        %p218 = pneg %p144
      $region30: #{anchor_mtgnn_forward.2} parent=11 // pred_check_branch
        %220 = sbr.rel (%p218) target = $region32
      $region31: #{anchor_mtgnn_forward.2} parent=11 // pred_region
        _
      $region32: #{anchor_mtgnn_forward.2} parent=11 // pred_fallthru
        _
      // Predicated region
      $region33: #{anchor_mtgnn_forward.2} parent=11 // pred_check
        %p221 = pneg %p165
      $region34: #{anchor_mtgnn_forward.2} parent=11 // pred_check_branch
        %223 = sbr.rel (%p221) target = $region36
      $region35: #{anchor_mtgnn_forward.2} parent=11 // pred_region
        _
      $region36: #{anchor_mtgnn_forward.2} parent=11 // pred_fallthru
        _
    $region12: #{anchor_mtgnn_forward.2} parent=5 // pred_fallthru
      _
    %p224 = scmp.lt.s32.totalorder %s13, 2
    // Predicated region
    $region37: #{anchor_mtgnn_forward.2} parent=5 // pred_check
      %p225 = pneg %p224
    $region38: #{anchor_mtgnn_forward.2} parent=5 // pred_check_branch
      %227 = sbr.rel (%p225) target = $region40
    $region39: #{anchor_mtgnn_forward.2} parent=5 // pred_region
      // Predicated region
      $region41: #{anchor_mtgnn_forward.2} parent=39 // pred_check
        %p228 = pneg %p33
      $region42: #{anchor_mtgnn_forward.2} parent=39 // pred_check_branch
        %230 = sbr.rel (%p228) target = $region44
      $region43: #{anchor_mtgnn_forward.2} parent=39 // pred_region
        %s231 = smul.u32 32, %s13
        %p232 = scmp.lt.s32.totalorder %s231, 63
        %s233 = scalar_select %p232, %s231, 63
        %s234 = smul.addr %s233, 4
        %s235 = scalar_lea.vmem %s0, %s234
        %s236 = smul.u32 32, %s13
      $region44: #{anchor_mtgnn_forward.2} parent=39 // pred_fallthru
        _
    $region40: #{anchor_mtgnn_forward.2} parent=5 // pred_fallthru
      _
    %p237 = scmp.le.s32.totalorder 1, %s13
    %p238 = scmp.lt.s32.totalorder %s13, 3
    %p239 = pnand %p237, %p238
    %p240 = pneg %p239
    // Predicated region
    $region45: #{anchor_mtgnn_forward.2} parent=5 // pred_check
      _
    $region46: #{anchor_mtgnn_forward.2} parent=5 // pred_check_branch
      %242 = sbr.rel (%p239) target = $region48
    $region47: #{anchor_mtgnn_forward.2} parent=5 // pred_region
      %s243 = ssub.s32 %s13, 1
      %s244 = smul.u32 32, %s18
      %p245 = scmp.lt.s32.totalorder %s244, 63
      %s246 = scalar_select %p245, %s244, 63
      %s247 = smul.addr %s246, 4
      %s248 = scalar_lea.vmem %s0, %s247
      %p249 = pneg %p39
      %p250 = pneg %p36
      %p251 = pneg %p60
      %p252 = pneg %p57
      %p253 = pneg %p81
      %p254 = pneg %p78
      %p255 = pneg %p102
      %p256 = pneg %p99
      %p257 = pneg %p123
      %p258 = pneg %p120
      %p259 = pneg %p144
      %p260 = pneg %p141
      %p261 = pneg %p165
      %p262 = pneg %p162
      %p263 = pneg %p191
      %p264 = pneg %p188
      %s265 = smul.u32 2, %s18
      %p266 = scmp.lt.s32.totalorder %s265, 3
      %s267 = scalar_select %p266, %s265, 3
      %s268 = smul.addr %s267, 8
      %s269 = scalar_lea.vmem %s7, %s268
      %s270 = smul.u32 32, %s18
      %p271 = scmp.lt.s32.totalorder %s270, 63
      %s272 = scalar_select %p271, %s270, 63
      %s273 = smul.addr %s272, 4
      %s274 = scalar_lea.vmem %s0, %s273
      %s275 = smul.u32 32, %s18
      %s276 = smul.u32 2, %s18
      %p277 = scmp.lt.s32.totalorder %s276, 3
      %s278 = scalar_select %p277, %s276, 3
      %s279 = smul.addr %s278, 8
      %s280 = scalar_lea.vmem %s7, %s279
      %s281 = smul.u32 2, %s18
      %v283 = vld [vmem:[%s274] sm:$0xf]
      %v284 = vld [vmem:[%s274 + $0x4] sm:$0xf]
      %v285 = vld [vmem:[%s274 + $0x8] sm:$0xf]
      %v286 = vld [vmem:[%s274 + $0xc] sm:$0xf]
      %v287 = vld [vmem:[%s274 + $0x10] sm:$0xf]
      %v288 = vld [vmem:[%s274 + $0x14] sm:$0xf]
      %v289 = vld [vmem:[%s274 + $0x18] sm:$0xf]
      %v290 = vld [vmem:[%s274 + $0x1c] sm:$0xf]
      %v291 = vld [vmem:[%s274 + $0x20] sm:$0xf]
      %v292 = vld [vmem:[%s274 + $0x24] sm:$0xf]
      %v293 = vld [vmem:[%s274 + $0x28] sm:$0xf]
      %v294 = vld [vmem:[%s274 + $0x2c] sm:$0xf]
      %v295 = vld [vmem:[%s274 + $0x30] sm:$0xf]
      %v296 = vld [vmem:[%s274 + $0x34] sm:$0xf]
      %v297 = vld [vmem:[%s274 + $0x38] sm:$0xf]
      %v298 = vld [vmem:[%s274 + $0x3c] sm:$0xf]
      %v299 = vld [vmem:[%s274 + $0x40] sm:$0xf]
      %v300 = vld [vmem:[%s274 + $0x44] sm:$0xf]
      %v301 = vld [vmem:[%s274 + $0x48] sm:$0xf]
      %v302 = vld [vmem:[%s274 + $0x4c] sm:$0xf]
      %v303 = vld [vmem:[%s274 + $0x50] sm:$0xf]
      %v304 = vld [vmem:[%s274 + $0x54] sm:$0xf]
      %v305 = vld [vmem:[%s274 + $0x58] sm:$0xf]
      %v306 = vld [vmem:[%s274 + $0x5c] sm:$0xf]
      %v307 = vld [vmem:[%s274 + $0x60] sm:$0xf]
      %v308 = vld [vmem:[%s274 + $0x64] sm:$0xf]
      %v309 = vld [vmem:[%s274 + $0x68] sm:$0xf]
      %v310 = vld [vmem:[%s274 + $0x6c] sm:$0xf]
      %v311 = vld [vmem:[%s274 + $0x70] sm:$0xf]
      %v312 = vld [vmem:[%s274 + $0x74] sm:$0xf]
      %v313 = vld [vmem:[%s274 + $0x78] sm:$0xf]
      %v314 = vld [vmem:[%s274 + $0x7c] sm:$0xf]
      %v315 = vld [vmem:[%s1] sm:$0xf]
      %v316 = vld [vmem:[%s1 + $0x4] sm:$0xf]
      %v317 = vld [vmem:[%s1 + $0x8] sm:$0xf]
      %v318 = vld [vmem:[%s1 + $0xc] sm:$0xf]
      %v319 = vld [vmem:[%s1 + $0x10] sm:$0xf]
      %v320 = vld [vmem:[%s1 + $0x14] sm:$0xf]
      %v321 = vld [vmem:[%s1 + $0x18] sm:$0xf]
      %v322 = vld [vmem:[%s1 + $0x1c] sm:$0xf]
      %v323 = vld [vmem:[%s2] sm:$0x1]
      %v325 = vlaneseq
      %v326 = vshrl.u32 %v325, 7
      %v327 = vsub.s32 0, %v326
      %v328 = vrot.slane %v323, %v327
      %v362 = vunpack.c.l.b16 %v283
      %v363 = vunpack.c.l.b16 %v284
      %v364 = vunpack.c.l.b16 %v285
      %v365 = vunpack.c.l.b16 %v286
      %v366 = vunpack.c.l.b16 %v287
      %v367 = vunpack.c.l.b16 %v288
      %v368 = vunpack.c.l.b16 %v289
      %v369 = vunpack.c.l.b16 %v290
      %v370 = vunpack.c.l.b16 %v291
      %v371 = vunpack.c.l.b16 %v292
      %v372 = vunpack.c.l.b16 %v293
      %v373 = vunpack.c.l.b16 %v294
      %v374 = vunpack.c.l.b16 %v295
      %v375 = vunpack.c.l.b16 %v296
      %v376 = vunpack.c.l.b16 %v297
      %v377 = vunpack.c.l.b16 %v298
      %v378 = vunpack.c.l.b16 %v299
      %v379 = vunpack.c.l.b16 %v300
      %v380 = vunpack.c.l.b16 %v301
      %v381 = vunpack.c.l.b16 %v302
      %v382 = vunpack.c.l.b16 %v303
      %v383 = vunpack.c.l.b16 %v304
      %v384 = vunpack.c.l.b16 %v305
      %v385 = vunpack.c.l.b16 %v306
      %v386 = vunpack.c.l.b16 %v307
      %v387 = vunpack.c.l.b16 %v308
      %v388 = vunpack.c.l.b16 %v309
      %v389 = vunpack.c.l.b16 %v310
      %v390 = vunpack.c.l.b16 %v311
      %v391 = vunpack.c.l.b16 %v312
      %v392 = vunpack.c.l.b16 %v313
      %v393 = vunpack.c.l.b16 %v314
      %v394 = vpack.c.b16 %v363, %v362
      %v395 = vpack.c.b16 %v365, %v364
      %v396 = vpack.c.b16 %v367, %v366
      %v397 = vpack.c.b16 %v369, %v368
      %v398 = vpack.c.b16 %v371, %v370
      %v399 = vpack.c.b16 %v373, %v372
      %v400 = vpack.c.b16 %v375, %v374
      %v401 = vpack.c.b16 %v377, %v376
      %v402 = vpack.c.b16 %v379, %v378
      %v403 = vpack.c.b16 %v381, %v380
      %v404 = vpack.c.b16 %v383, %v382
      %v405 = vpack.c.b16 %v385, %v384
      %v406 = vpack.c.b16 %v387, %v386
      %v407 = vpack.c.b16 %v389, %v388
      %v408 = vpack.c.b16 %v391, %v390
      %v409 = vpack.c.b16 %v393, %v392
      %v418 = vunpack.c.l.b16 %v315
      %v419 = vunpack.c.l.b16 %v316
      %v420 = vunpack.c.l.b16 %v317
      %v421 = vunpack.c.l.b16 %v318
      %v422 = vunpack.c.l.b16 %v319
      %v423 = vunpack.c.l.b16 %v320
      %v424 = vunpack.c.l.b16 %v321
      %v425 = vunpack.c.l.b16 %v322
      %v426 = vpack.c.b16 %v419, %v418
      %v427 = vpack.c.b16 %v421, %v420
      %v428 = vpack.c.b16 %v423, %v422
      %v429 = vpack.c.b16 %v425, %v424
      %vm434 = vcmask 523264
      %v436 = vsel %vm434, %v394, 0
      %v439 = vsel %vm434, %v395, 0
      %v442 = vsel %vm434, %v396, 0
      %v445 = vsel %vm434, %v397, 0
      %v448 = vsel %vm434, %v398, 0
      %v451 = vsel %vm434, %v399, 0
      %v454 = vsel %vm434, %v400, 0
      %v457 = vsel %vm434, %v401, 0
      %v460 = vsel %vm434, %v402, 0
      %v463 = vsel %vm434, %v403, 0
      %v466 = vsel %vm434, %v404, 0
      %v469 = vsel %vm434, %v405, 0
      %v472 = vsel %vm434, %v406, 0
      %v475 = vsel %vm434, %v407, 0
      %v478 = vsel %vm434, %v408, 0
      %v481 = vsel %vm434, %v409, 0
      %483 = vmatprep.subr.bf16.mxu0 0
      %484 = vmatpush1.bf16.msra.mxu0 %v426
      %485 = vmatprep.subr.bf16.mxu0 0
      %486 = vmatpush1.bf16.msra.mxu0 %v427
      %487 = vmatprep.subr.bf16.mxu0 0
      %488 = vmatpush1.bf16.msra.mxu0 %v428
      %489 = vmatprep.subr.bf16.mxu0 0
      %490 = vmatpush1.bf16.msra.mxu0 %v429
      %491 = vmatprep.subr.bf16.mxu0 0
      %492 = vmatpush1.bf16.msra.mxu0 0
      %493 = vmatprep.subr.bf16.mxu0 0
      %494 = vmatpush1.bf16.msra.mxu0 0
      %495 = vmatprep.subr.bf16.mxu0 0
      %496 = vmatpush1.bf16.msra.mxu0 0
      %497 = vmatprep.subr.bf16.mxu0 0
      %498 = vmatpush1.bf16.msra.mxu0 0
      %499 = vmatprep.subr.bf16.mxu0 0
      %500 = vmatpush1.bf16.msra.mxu0 0
      %501 = vmatprep.subr.bf16.mxu0 0
      %502 = vmatpush1.bf16.msra.mxu0 0
      %503 = vmatprep.subr.bf16.mxu0 0
      %504 = vmatpush1.bf16.msra.mxu0 0
      %505 = vmatprep.subr.bf16.mxu0 0
      %506 = vmatpush1.bf16.msra.mxu0 0
      %507 = vmatprep.subr.bf16.mxu0 0
      %508 = vmatpush1.bf16.msra.mxu0 0
      %509 = vmatprep.subr.bf16.mxu0 0
      %510 = vmatpush1.bf16.msra.mxu0 0
      %511 = vmatprep.subr.bf16.mxu0 0
      %512 = vmatpush1.bf16.msra.mxu0 0
      %513 = vmatprep.subr.bf16.mxu0 0
      %514 = vmatpush1.bf16.msra.mxu0 0
      %515 = vmatprep.mubr.bf16.mxu0 0
      %516 = vmatmul.mubr.bf16.gmra.mrb[0].mxu0 %v436
      %v517 = vpop.f32.mrb[0].mxu0
      %v518 = vadd.f32 %v328, %v517
      %v519 = vpop.f32.mrb[0].mxu0
      %v520 = vpop.f32.mrb[0].mxu0
      %v521 = vadd.f32 %v328, %v520
      %v522 = vpop.f32.mrb[0].mxu0
      %523 = vmatprep.mubr.bf16.mxu0 0
      %524 = vmatmul.mubr.bf16.gmra.mrb[0].mxu0 %v439
      %v525 = vpop.f32.mrb[0].mxu0
      %v526 = vadd.f32 %v328, %v525
      %v527 = vpop.f32.mrb[0].mxu0
      %v528 = vpop.f32.mrb[0].mxu0
      %v529 = vadd.f32 %v328, %v528
      %v530 = vpop.f32.mrb[0].mxu0
      %531 = vmatprep.mubr.bf16.mxu0 0
      %532 = vmatmul.mubr.bf16.gmra.mrb[0].mxu0 %v442
      %v533 = vpop.f32.mrb[0].mxu0
      %v534 = vadd.f32 %v328, %v533
      %v535 = vpop.f32.mrb[0].mxu0
      %v536 = vpop.f32.mrb[0].mxu0
      %v537 = vadd.f32 %v328, %v536
      %v538 = vpop.f32.mrb[0].mxu0
      %539 = vmatprep.mubr.bf16.mxu0 0
      %540 = vmatmul.mubr.bf16.gmra.mrb[0].mxu0 %v445
      %v541 = vpop.f32.mrb[0].mxu0
      %v542 = vadd.f32 %v328, %v541
      %v543 = vpop.f32.mrb[0].mxu0
      %v544 = vpop.f32.mrb[0].mxu0
      %v545 = vadd.f32 %v328, %v544
      %v546 = vpop.f32.mrb[0].mxu0
      %547 = vmatprep.mubr.bf16.mxu0 0
      %548 = vmatmul.mubr.bf16.gmra.mrb[0].mxu0 %v448
      %v549 = vpop.f32.mrb[0].mxu0
      %v550 = vadd.f32 %v328, %v549
      %v551 = vpop.f32.mrb[0].mxu0
      %v552 = vpop.f32.mrb[0].mxu0
      %v553 = vadd.f32 %v328, %v552
      %v554 = vpop.f32.mrb[0].mxu0
      %555 = vmatprep.mubr.bf16.mxu0 0
      %556 = vmatmul.mubr.bf16.gmra.mrb[0].mxu0 %v451
      %v557 = vpop.f32.mrb[0].mxu0
      %v558 = vadd.f32 %v328, %v557
      %v559 = vpop.f32.mrb[0].mxu0
      %v560 = vpop.f32.mrb[0].mxu0
      %v561 = vadd.f32 %v328, %v560
      %v562 = vpop.f32.mrb[0].mxu0
      %563 = vmatprep.mubr.bf16.mxu0 0
      %564 = vmatmul.mubr.bf16.gmra.mrb[0].mxu0 %v454
      %v565 = vpop.f32.mrb[0].mxu0
      %v566 = vadd.f32 %v328, %v565
      %v567 = vpop.f32.mrb[0].mxu0
      %v568 = vpop.f32.mrb[0].mxu0
      %v569 = vadd.f32 %v328, %v568
      %v570 = vpop.f32.mrb[0].mxu0
      %571 = vmatprep.mubr.bf16.mxu0 0
      %572 = vmatmul.mubr.bf16.gmra.mrb[0].mxu0 %v457
      %v573 = vpop.f32.mrb[0].mxu0
      %v574 = vadd.f32 %v328, %v573
      %v575 = vpop.f32.mrb[0].mxu0
      %v576 = vpop.f32.mrb[0].mxu0
      %v577 = vadd.f32 %v328, %v576
      %v578 = vpop.f32.mrb[0].mxu0
      %579 = vmatprep.mubr.bf16.mxu0 0
      %580 = vmatmul.mubr.bf16.gmra.mrb[0].mxu0 %v460
      %v581 = vpop.f32.mrb[0].mxu0
      %v582 = vadd.f32 %v328, %v581
      %v583 = vpop.f32.mrb[0].mxu0
      %v584 = vpop.f32.mrb[0].mxu0
      %v585 = vadd.f32 %v328, %v584
      %v586 = vpop.f32.mrb[0].mxu0
      %587 = vmatprep.mubr.bf16.mxu0 0
      %588 = vmatmul.mubr.bf16.gmra.mrb[0].mxu0 %v463
      %v589 = vpop.f32.mrb[0].mxu0
      %v590 = vadd.f32 %v328, %v589
      %v591 = vpop.f32.mrb[0].mxu0
      %v592 = vpop.f32.mrb[0].mxu0
      %v593 = vadd.f32 %v328, %v592
      %v594 = vpop.f32.mrb[0].mxu0
      %595 = vmatprep.mubr.bf16.mxu0 0
      %596 = vmatmul.mubr.bf16.gmra.mrb[0].mxu0 %v466
      %v597 = vpop.f32.mrb[0].mxu0
      %v598 = vadd.f32 %v328, %v597
      %v599 = vpop.f32.mrb[0].mxu0
      %v600 = vpop.f32.mrb[0].mxu0
      %v601 = vadd.f32 %v328, %v600
      %v602 = vpop.f32.mrb[0].mxu0
      %603 = vmatprep.mubr.bf16.mxu0 0
      %604 = vmatmul.mubr.bf16.gmra.mrb[0].mxu0 %v469
      %v605 = vpop.f32.mrb[0].mxu0
      %v606 = vadd.f32 %v328, %v605
      %v607 = vpop.f32.mrb[0].mxu0
      %v608 = vpop.f32.mrb[0].mxu0
      %v609 = vadd.f32 %v328, %v608
      %v610 = vpop.f32.mrb[0].mxu0
      %611 = vmatprep.mubr.bf16.mxu0 0
      %612 = vmatmul.mubr.bf16.gmra.mrb[0].mxu0 %v472
      %v613 = vpop.f32.mrb[0].mxu0
      %v614 = vadd.f32 %v328, %v613
      %v615 = vpop.f32.mrb[0].mxu0
      %v616 = vpop.f32.mrb[0].mxu0
      %v617 = vadd.f32 %v328, %v616
      %v618 = vpop.f32.mrb[0].mxu0
      %619 = vmatprep.mubr.bf16.mxu0 0
      %620 = vmatmul.mubr.bf16.gmra.mrb[0].mxu0 %v475
      %v621 = vpop.f32.mrb[0].mxu0
      %v622 = vadd.f32 %v328, %v621
      %v623 = vpop.f32.mrb[0].mxu0
      %v624 = vpop.f32.mrb[0].mxu0
      %v625 = vadd.f32 %v328, %v624
      %v626 = vpop.f32.mrb[0].mxu0
      %627 = vmatprep.mubr.bf16.mxu0 0
      %628 = vmatmul.mubr.bf16.gmra.mrb[0].mxu0 %v478
      %v629 = vpop.f32.mrb[0].mxu0
      %v630 = vadd.f32 %v328, %v629
      %v631 = vpop.f32.mrb[0].mxu0
      %v632 = vpop.f32.mrb[0].mxu0
      %v633 = vadd.f32 %v328, %v632
      %v634 = vpop.f32.mrb[0].mxu0
      %635 = vmatprep.mubr.bf16.mxu0 0
      %636 = vmatmul.mubr.bf16.gmra.mrb[0].mxu0 %v481
      %v637 = vpop.f32.mrb[0].mxu0
      %v638 = vadd.f32 %v328, %v637
      %v639 = vpop.f32.mrb[0].mxu0
      %v640 = vpop.f32.mrb[0].mxu0
      %v641 = vadd.f32 %v328, %v640
      %v642 = vpop.f32.mrb[0].mxu0
      %643 = vdwg.mxu0
      %v644 = vpack.c.bf16 %v521, %v518
      %v645 = vpack.c.bf16 %v529, %v526
      %v646 = vpack.c.bf16 %v537, %v534
      %v647 = vpack.c.bf16 %v545, %v542
      %v648 = vpack.c.bf16 %v553, %v550
      %v649 = vpack.c.bf16 %v561, %v558
      %v650 = vpack.c.bf16 %v569, %v566
      %v651 = vpack.c.bf16 %v577, %v574
      %v652 = vpack.c.bf16 %v585, %v582
      %v653 = vpack.c.bf16 %v593, %v590
      %v654 = vpack.c.bf16 %v601, %v598
      %v655 = vpack.c.bf16 %v609, %v606
      %v656 = vpack.c.bf16 %v617, %v614
      %v657 = vpack.c.bf16 %v625, %v622
      %v658 = vpack.c.bf16 %v633, %v630
      %v659 = vpack.c.bf16 %v641, %v638
      %v660 = vld [vmem:[%s3] sm:$0xf]
      %v661 = vld [vmem:[%s3 + $0x4] sm:$0xf]
      %v662 = vld [vmem:[%s3 + $0x8] sm:$0xf]
      %v663 = vld [vmem:[%s3 + $0xc] sm:$0xf]
      %v664 = vld [vmem:[%s3 + $0x10] sm:$0xf]
      %v665 = vld [vmem:[%s3 + $0x14] sm:$0xf]
      %v666 = vld [vmem:[%s3 + $0x18] sm:$0xf]
      %v667 = vld [vmem:[%s3 + $0x1c] sm:$0xf]
      %v668 = vld [vmem:[%s4] sm:$0x1]
      %v670 = vlaneseq
      %v671 = vshrl.u32 %v670, 7
      %v672 = vsub.s32 0, %v671
      %v673 = vrot.slane %v668, %v672
      %v683 = vunpack.c.l.b16 %v660
      %v684 = vunpack.c.l.b16 %v661
      %v685 = vunpack.c.l.b16 %v662
      %v686 = vunpack.c.l.b16 %v663
      %v687 = vunpack.c.l.b16 %v664
      %v688 = vunpack.c.l.b16 %v665
      %v689 = vunpack.c.l.b16 %v666
      %v690 = vunpack.c.l.b16 %v667
      %v691 = vpack.c.b16 %v684, %v683
      %v692 = vpack.c.b16 %v686, %v685
      %v693 = vpack.c.b16 %v688, %v687
      %v694 = vpack.c.b16 %v690, %v689
      %v700 = vsel %vm434, %v644, 0
      %v703 = vsel %vm434, %v645, 0
      %v706 = vsel %vm434, %v646, 0
      %v709 = vsel %vm434, %v647, 0
      %v712 = vsel %vm434, %v648, 0
      %v715 = vsel %vm434, %v649, 0
      %v718 = vsel %vm434, %v650, 0
      %v721 = vsel %vm434, %v651, 0
      %v724 = vsel %vm434, %v652, 0
      %v727 = vsel %vm434, %v653, 0
      %v730 = vsel %vm434, %v654, 0
      %v733 = vsel %vm434, %v655, 0
      %v736 = vsel %vm434, %v656, 0
      %v739 = vsel %vm434, %v657, 0
      %v742 = vsel %vm434, %v658, 0
      %v745 = vsel %vm434, %v659, 0
      %747 = vmatprep.subr.bf16.mxu0 0
      %748 = vmatpush1.bf16.msra.mxu0 %v691
      %749 = vmatprep.subr.bf16.mxu0 0
      %750 = vmatpush1.bf16.msra.mxu0 %v692
      %751 = vmatprep.subr.bf16.mxu0 0
      %752 = vmatpush1.bf16.msra.mxu0 %v693
      %753 = vmatprep.subr.bf16.mxu0 0
      %754 = vmatpush1.bf16.msra.mxu0 %v694
      %755 = vmatprep.subr.bf16.mxu0 0
      %756 = vmatpush1.bf16.msra.mxu0 0
      %757 = vmatprep.subr.bf16.mxu0 0
      %758 = vmatpush1.bf16.msra.mxu0 0
      %759 = vmatprep.subr.bf16.mxu0 0
      %760 = vmatpush1.bf16.msra.mxu0 0
      %761 = vmatprep.subr.bf16.mxu0 0
      %762 = vmatpush1.bf16.msra.mxu0 0
      %763 = vmatprep.subr.bf16.mxu0 0
      %764 = vmatpush1.bf16.msra.mxu0 0
      %765 = vmatprep.subr.bf16.mxu0 0
      %766 = vmatpush1.bf16.msra.mxu0 0
      %767 = vmatprep.subr.bf16.mxu0 0
      %768 = vmatpush1.bf16.msra.mxu0 0
      %769 = vmatprep.subr.bf16.mxu0 0
      %770 = vmatpush1.bf16.msra.mxu0 0
      %771 = vmatprep.subr.bf16.mxu0 0
      %772 = vmatpush1.bf16.msra.mxu0 0
      %773 = vmatprep.subr.bf16.mxu0 0
      %774 = vmatpush1.bf16.msra.mxu0 0
      %775 = vmatprep.subr.bf16.mxu0 0
      %776 = vmatpush1.bf16.msra.mxu0 0
      %777 = vmatprep.subr.bf16.mxu0 0
      %778 = vmatpush1.bf16.msra.mxu0 0
      %779 = vmatprep.mubr.bf16.mxu0 0
      %780 = vmatmul.mubr.bf16.gmra.mrb[0].mxu0 %v700
      %v781 = vpop.f32.mrb[0].mxu0
      %v782 = vadd.f32 %v673, %v781
      %v783 = vpop.f32.mrb[0].mxu0
      %v784 = vpop.f32.mrb[0].mxu0
      %v785 = vadd.f32 %v673, %v784
      %v786 = vpop.f32.mrb[0].mxu0
      %787 = vmatprep.mubr.bf16.mxu0 0
      %788 = vmatmul.mubr.bf16.gmra.mrb[0].mxu0 %v703
      %v789 = vpop.f32.mrb[0].mxu0
      %v790 = vadd.f32 %v673, %v789
      %v791 = vpop.f32.mrb[0].mxu0
      %v792 = vpop.f32.mrb[0].mxu0
      %v793 = vadd.f32 %v673, %v792
      %v794 = vpop.f32.mrb[0].mxu0
      %795 = vmatprep.mubr.bf16.mxu0 0
      %796 = vmatmul.mubr.bf16.gmra.mrb[0].mxu0 %v706
      %v797 = vpop.f32.mrb[0].mxu0
      %v798 = vadd.f32 %v673, %v797
      %v799 = vpop.f32.mrb[0].mxu0
      %v800 = vpop.f32.mrb[0].mxu0
      %v801 = vadd.f32 %v673, %v800
      %v802 = vpop.f32.mrb[0].mxu0
      %803 = vmatprep.mubr.bf16.mxu0 0
      %804 = vmatmul.mubr.bf16.gmra.mrb[0].mxu0 %v709
      %v805 = vpop.f32.mrb[0].mxu0
      %v806 = vadd.f32 %v673, %v805
      %v807 = vpop.f32.mrb[0].mxu0
      %v808 = vpop.f32.mrb[0].mxu0
      %v809 = vadd.f32 %v673, %v808
      %v810 = vpop.f32.mrb[0].mxu0
      %811 = vmatprep.mubr.bf16.mxu0 0
      %812 = vmatmul.mubr.bf16.gmra.mrb[0].mxu0 %v712
      %v813 = vpop.f32.mrb[0].mxu0
      %v814 = vadd.f32 %v673, %v813
      %v815 = vpop.f32.mrb[0].mxu0
      %v816 = vpop.f32.mrb[0].mxu0
      %v817 = vadd.f32 %v673, %v816
      %v818 = vpop.f32.mrb[0].mxu0
      %819 = vmatprep.mubr.bf16.mxu0 0
      %820 = vmatmul.mubr.bf16.gmra.mrb[0].mxu0 %v715
      %v821 = vpop.f32.mrb[0].mxu0
      %v822 = vadd.f32 %v673, %v821
      %v823 = vpop.f32.mrb[0].mxu0
      %v824 = vpop.f32.mrb[0].mxu0
      %v825 = vadd.f32 %v673, %v824
      %v826 = vpop.f32.mrb[0].mxu0
      %827 = vmatprep.mubr.bf16.mxu0 0
      %828 = vmatmul.mubr.bf16.gmra.mrb[0].mxu0 %v718
      %v829 = vpop.f32.mrb[0].mxu0
      %v830 = vadd.f32 %v673, %v829
      %v831 = vpop.f32.mrb[0].mxu0
      %v832 = vpop.f32.mrb[0].mxu0
      %v833 = vadd.f32 %v673, %v832
      %v834 = vpop.f32.mrb[0].mxu0
      %835 = vmatprep.mubr.bf16.mxu0 0
      %836 = vmatmul.mubr.bf16.gmra.mrb[0].mxu0 %v721
      %v837 = vpop.f32.mrb[0].mxu0
      %v838 = vadd.f32 %v673, %v837
      %v839 = vpop.f32.mrb[0].mxu0
      %v840 = vpop.f32.mrb[0].mxu0
      %v841 = vadd.f32 %v673, %v840
      %v842 = vpop.f32.mrb[0].mxu0
      %843 = vmatprep.mubr.bf16.mxu0 0
      %844 = vmatmul.mubr.bf16.gmra.mrb[0].mxu0 %v724
      %v845 = vpop.f32.mrb[0].mxu0
      %v846 = vadd.f32 %v673, %v845
      %v847 = vpop.f32.mrb[0].mxu0
      %v848 = vpop.f32.mrb[0].mxu0
      %v849 = vadd.f32 %v673, %v848
      %v850 = vpop.f32.mrb[0].mxu0
      %851 = vmatprep.mubr.bf16.mxu0 0
      %852 = vmatmul.mubr.bf16.gmra.mrb[0].mxu0 %v727
      %v853 = vpop.f32.mrb[0].mxu0
      %v854 = vadd.f32 %v673, %v853
      %v855 = vpop.f32.mrb[0].mxu0
      %v856 = vpop.f32.mrb[0].mxu0
      %v857 = vadd.f32 %v673, %v856
      %v858 = vpop.f32.mrb[0].mxu0
      %859 = vmatprep.mubr.bf16.mxu0 0
      %860 = vmatmul.mubr.bf16.gmra.mrb[0].mxu0 %v730
      %v861 = vpop.f32.mrb[0].mxu0
      %v862 = vadd.f32 %v673, %v861
      %v863 = vpop.f32.mrb[0].mxu0
      %v864 = vpop.f32.mrb[0].mxu0
      %v865 = vadd.f32 %v673, %v864
      %v866 = vpop.f32.mrb[0].mxu0
      %867 = vmatprep.mubr.bf16.mxu0 0
      %868 = vmatmul.mubr.bf16.gmra.mrb[0].mxu0 %v733
      %v869 = vpop.f32.mrb[0].mxu0
      %v870 = vadd.f32 %v673, %v869
      %v871 = vpop.f32.mrb[0].mxu0
      %v872 = vpop.f32.mrb[0].mxu0
      %v873 = vadd.f32 %v673, %v872
      %v874 = vpop.f32.mrb[0].mxu0
      %875 = vmatprep.mubr.bf16.mxu0 0
      %876 = vmatmul.mubr.bf16.gmra.mrb[0].mxu0 %v736
      %v877 = vpop.f32.mrb[0].mxu0
      %v878 = vadd.f32 %v673, %v877
      %v879 = vpop.f32.mrb[0].mxu0
      %v880 = vpop.f32.mrb[0].mxu0
      %v881 = vadd.f32 %v673, %v880
      %v882 = vpop.f32.mrb[0].mxu0
      %883 = vmatprep.mubr.bf16.mxu0 0
      %884 = vmatmul.mubr.bf16.gmra.mrb[0].mxu0 %v739
      %v885 = vpop.f32.mrb[0].mxu0
      %v886 = vadd.f32 %v673, %v885
      %v887 = vpop.f32.mrb[0].mxu0
      %v888 = vpop.f32.mrb[0].mxu0
      %v889 = vadd.f32 %v673, %v888
      %v890 = vpop.f32.mrb[0].mxu0
      %891 = vmatprep.mubr.bf16.mxu0 0
      %892 = vmatmul.mubr.bf16.gmra.mrb[0].mxu0 %v742
      %v893 = vpop.f32.mrb[0].mxu0
      %v894 = vadd.f32 %v673, %v893
      %v895 = vpop.f32.mrb[0].mxu0
      %v896 = vpop.f32.mrb[0].mxu0
      %v897 = vadd.f32 %v673, %v896
      %v898 = vpop.f32.mrb[0].mxu0
      %899 = vmatprep.mubr.bf16.mxu0 0
      %900 = vmatmul.mubr.bf16.gmra.mrb[0].mxu0 %v745
      %v901 = vpop.f32.mrb[0].mxu0
      %v902 = vadd.f32 %v673, %v901
      %v903 = vpop.f32.mrb[0].mxu0
      %v904 = vpop.f32.mrb[0].mxu0
      %v905 = vadd.f32 %v673, %v904
      %v906 = vpop.f32.mrb[0].mxu0
      %907 = vdwg.mxu0
      %v908 = vmax.f32 %v782, 0.0
      %v909 = vmax.f32 %v785, 0.0
      %v910 = vmax.f32 %v790, 0.0
      %v911 = vmax.f32 %v793, 0.0
      %v912 = vmax.f32 %v798, 0.0
      %v913 = vmax.f32 %v801, 0.0
      %v914 = vmax.f32 %v806, 0.0
      %v915 = vmax.f32 %v809, 0.0
      %v916 = vmax.f32 %v814, 0.0
      %v917 = vmax.f32 %v817, 0.0
      %v918 = vmax.f32 %v822, 0.0
      %v919 = vmax.f32 %v825, 0.0
      %v920 = vmax.f32 %v830, 0.0
      %v921 = vmax.f32 %v833, 0.0
      %v922 = vmax.f32 %v838, 0.0
      %v923 = vmax.f32 %v841, 0.0
      %v924 = vmax.f32 %v846, 0.0
      %v925 = vmax.f32 %v849, 0.0
      %v926 = vmax.f32 %v854, 0.0
      %v927 = vmax.f32 %v857, 0.0
      %v928 = vmax.f32 %v862, 0.0
      %v929 = vmax.f32 %v865, 0.0
      %v930 = vmax.f32 %v870, 0.0
      %v931 = vmax.f32 %v873, 0.0
      %v932 = vmax.f32 %v878, 0.0
      %v933 = vmax.f32 %v881, 0.0
      %v934 = vmax.f32 %v886, 0.0
      %v935 = vmax.f32 %v889, 0.0
      %v936 = vmax.f32 %v894, 0.0
      %v937 = vmax.f32 %v897, 0.0
      %v938 = vmax.f32 %v902, 0.0
      %v939 = vmax.f32 %v905, 0.0
      %v940 = vld [vmem:[%s5] sm:$0xf]
      %v941 = vpack.c.bf16 %v909, %v908
      %v942 = vpack.c.bf16 %v911, %v910
      %v943 = vpack.c.bf16 %v913, %v912
      %v944 = vpack.c.bf16 %v915, %v914
      %v945 = vpack.c.bf16 %v917, %v916
      %v946 = vpack.c.bf16 %v919, %v918
      %v947 = vpack.c.bf16 %v921, %v920
      %v948 = vpack.c.bf16 %v923, %v922
      %v949 = vpack.c.bf16 %v925, %v924
      %v950 = vpack.c.bf16 %v927, %v926
      %v951 = vpack.c.bf16 %v929, %v928
      %v952 = vpack.c.bf16 %v931, %v930
      %v953 = vpack.c.bf16 %v933, %v932
      %v954 = vpack.c.bf16 %v935, %v934
      %v955 = vpack.c.bf16 %v937, %v936
      %v956 = vpack.c.bf16 %v939, %v938
      %v957 = vld [vmem:[%s6] sm:$0xff]
      %959 = vset.pattern.permute.xlu0 0
      %960 = vperm.xlu0 %959, %v957
      %v961 = vpop.permute.xlu0 %960
      %v964 = vsel %vm434, %v940, 0
      %v967 = vsel %vm434, %v941, 0
      %v970 = vsel %vm434, %v942, 0
      %v973 = vsel %vm434, %v943, 0
      %v976 = vsel %vm434, %v944, 0
      %v979 = vsel %vm434, %v945, 0
      %v982 = vsel %vm434, %v946, 0
      %v985 = vsel %vm434, %v947, 0
      %v988 = vsel %vm434, %v948, 0
      %v991 = vsel %vm434, %v949, 0
      %v994 = vsel %vm434, %v950, 0
      %v997 = vsel %vm434, %v951, 0
      %v1000 = vsel %vm434, %v952, 0
      %v1003 = vsel %vm434, %v953, 0
      %v1006 = vsel %vm434, %v954, 0
      %v1009 = vsel %vm434, %v955, 0
      %v1012 = vsel %vm434, %v956, 0
      %1014 = vmatprep.subr.bf16.mxu0 0
      %1015 = vmatpush1.bf16.xpose.msra.mxu0 %v967
      %1016 = vmatprep.subr.bf16.mxu0 0
      %1017 = vmatpush1.bf16.xpose.msra.mxu0 %v970
      %1018 = vmatprep.subr.bf16.mxu0 0
      %1019 = vmatpush1.bf16.xpose.msra.mxu0 %v973
      %1020 = vmatprep.subr.bf16.mxu0 0
      %1021 = vmatpush1.bf16.xpose.msra.mxu0 %v976
      %1022 = vmatprep.subr.bf16.mxu0 0
      %1023 = vmatpush1.bf16.xpose.msra.mxu0 %v979
      %1024 = vmatprep.subr.bf16.mxu0 0
      %1025 = vmatpush1.bf16.xpose.msra.mxu0 %v982
      %1026 = vmatprep.subr.bf16.mxu0 0
      %1027 = vmatpush1.bf16.xpose.msra.mxu0 %v985
      %1028 = vmatprep.subr.bf16.mxu0 0
      %1029 = vmatpush1.bf16.xpose.msra.mxu0 %v988
      %1030 = vmatprep.subr.bf16.mxu0 0
      %1031 = vmatpush1.bf16.xpose.msra.mxu0 %v991
      %1032 = vmatprep.subr.bf16.mxu0 0
      %1033 = vmatpush1.bf16.xpose.msra.mxu0 %v994
      %1034 = vmatprep.subr.bf16.mxu0 0
      %1035 = vmatpush1.bf16.xpose.msra.mxu0 %v997
      %1036 = vmatprep.subr.bf16.mxu0 0
      %1037 = vmatpush1.bf16.xpose.msra.mxu0 %v1000
      %1038 = vmatprep.subr.bf16.mxu0 0
      %1039 = vmatpush1.bf16.xpose.msra.mxu0 %v1003
      %1040 = vmatprep.subr.bf16.mxu0 0
      %1041 = vmatpush1.bf16.xpose.msra.mxu0 %v1006
      %1042 = vmatprep.subr.bf16.mxu0 0
      %1043 = vmatpush1.bf16.xpose.msra.mxu0 %v1009
      %1044 = vmatprep.subr.bf16.mxu0 0
      %1045 = vmatpush1.bf16.xpose.msra.mxu0 %v1012
      %1046 = vmatprep.mubr.bf16.mxu0 0
      %1047 = vmatmul.mubr.bf16.gmra.mrb[0].mxu0 %v964
      %v1048 = vpop.f32.mrb[0].mxu0
      %v1049 = vadd.f32 %v961, %v1048
      %v1050 = vpop.f32.mrb[0].mxu0
      %v1051 = vadd.f32 %v961, %v1050
      %v1052 = vpop.f32.mrb[0].mxu0
      %v1053 = vpop.f32.mrb[0].mxu0
      %1054 = vdwg.mxu0
      %1055 = vst [vmem:[%s280] sm:$0xff] %v1049
      %1056 = vst [vmem:[%s280 + $0x8] sm:$0xff] %v1051
      %s1057 = smul.u32 2, %s18
      %p1058 = scmp.lt.s32.totalorder %s1057, 3
      %s1059 = scalar_select %p1058, %s1057, 3
      %s1060 = smul.addr %s1059, 8
      %s1061 = scalar_lea.vmem %s7, %s1060
      // Predicated region
      $region49: #{anchor_mtgnn_forward.2} parent=47 // pred_check
        %p1062 = pneg %p188
      $region50: #{anchor_mtgnn_forward.2} parent=47 // pred_check_branch
        %1064 = sbr.rel (%p1062) target = $region52
      $region51: #{anchor_mtgnn_forward.2} parent=47 // pred_region
        %s1065 = smul.u32 2, %s18
      $region52: #{anchor_mtgnn_forward.2} parent=47 // pred_fallthru
        _
    $region48: #{anchor_mtgnn_forward.2} parent=5 // pred_fallthru
      _
    %p1066 = scmp.le.s32.totalorder 2, %s13
    // Predicated region
    $region53: #{anchor_mtgnn_forward.2} parent=5 // pred_check
      %p1067 = pneg %p1066
    $region54: #{anchor_mtgnn_forward.2} parent=5 // pred_check_branch
      %1069 = sbr.rel (%p1067) target = $region56
    $region55: #{anchor_mtgnn_forward.2} parent=5 // pred_region
      %s1070 = ssub.s32 %s13, 2
      // Predicated region
      $region57: #{anchor_mtgnn_forward.2} parent=55 // pred_check
        %p1071 = pneg %p194
      $region58: #{anchor_mtgnn_forward.2} parent=55 // pred_check_branch
        %1073 = sbr.rel (%p1071) target = $region60
      $region59: #{anchor_mtgnn_forward.2} parent=55 // pred_region
        %s1074 = smul.u32 2, %s19
        %p1075 = scmp.lt.s32.totalorder %s1074, 3
        %s1076 = scalar_select %p1075, %s1074, 3
        %s1077 = smul.addr %s1076, 8
        %s1078 = scalar_lea.vmem %s7, %s1077
      $region60: #{anchor_mtgnn_forward.2} parent=55 // pred_fallthru
        _
    $region56: #{anchor_mtgnn_forward.2} parent=5 // pred_fallthru
      _
  $region6: #{anchor_mtgnn_forward.2} parent=0 // loop_footer
    %s17 = sadd.s32 1, %s13
  $region7: #{anchor_mtgnn_forward.2} parent=0 // loop_footer_branch
    %12 = sbr.rel target = $region3
  $region8: #{anchor_mtgnn_forward.2} parent=0 // loop_exit
    _

</llo_original>
